<compile_context>
chip_gen: v7x
topology: tpu7x:2x2x1
jax: 0.10.0
libtpu: 0.0.40
codegen_flags: <defaults>
</compile_context>

<pallas_src>
import numpy as np
import jax
import jax.numpy as jnp
from jax import lax
from jax.experimental import pallas as pl
from jax.experimental.pallas import tpu as pltpu


# ---------------------------------------------------------------------------
# Host-side (glue): 1-D linear operators for AdaptiveAvgPool2d + bilinear
# upsample (align_corners=False), kept factored (never a dense (HW, HW)).
# ---------------------------------------------------------------------------
def _adaptive_pool_matrix(in_size: int, out_size: int) -> np.ndarray:
    """(out_size, in_size) row-stochastic matrix matching nn.AdaptiveAvgPool2d."""
    M = np.zeros((out_size, in_size), dtype=np.float32)
    for i in range(out_size):
        start = (i * in_size) // out_size
        end = -((-(i + 1) * in_size) // out_size)  # ceil((i+1)*in/out)
        M[i, start:end] = 1.0 / (end - start)
    return M


def _bilinear_upsample_matrix(out_size: int, in_size: int) -> np.ndarray:
    """(out_size, in_size) matrix matching F.interpolate(mode='bilinear',
    align_corners=False) along one axis."""
    M = np.zeros((out_size, in_size), dtype=np.float32)
    scale = in_size / out_size
    for i in range(out_size):
        src = max((i + 0.5) * scale - 0.5, 0.0)
        i0 = min(int(np.floor(src)), in_size - 1)
        i1 = min(i0 + 1, in_size - 1)
        lam = src - i0
        M[i, i0] += 1.0 - lam
        M[i, i1] += lam
    return M


def _build_factored_operators(H: int, W: int, pool_sizes):
    """P_all: (S2, HW) pooling, U_all: (HW, S2) upsampling, S2 = sum(s^2).
    Spatial index is row-major h*W + w, matching reshape of (H, W)."""
    P_rows, U_cols = [], []
    for s in pool_sizes:
        Ph = _adaptive_pool_matrix(H, s)        # (s, H)
        Pw = _adaptive_pool_matrix(W, s)        # (s, W)
        Uh = _bilinear_upsample_matrix(H, s)    # (H, s)
        Uw = _bilinear_upsample_matrix(W, s)    # (W, s)
        P_rows.append(np.kron(Ph, Pw))          # (s*s, H*W)
        U_cols.append(np.kron(Uh, Uw))          # (H*W, s*s)
    P_all = np.concatenate(P_rows, axis=0).astype(np.float32)
    U_all = np.concatenate(U_cols, axis=1).astype(np.float32)
    return P_all, U_all


def _round_up(x: int, m: int) -> int:
    return ((x + m - 1) // m) * m


# ---------------------------------------------------------------------------
# Pallas kernel (channels-first)
# ---------------------------------------------------------------------------
def _make_ppm_kernel(level_rows, s2_pad, c_out_pad, tile_hw):
    """level_rows: static tuple of s^2 per pyramid level."""

    def kernel(x_ref, pt_ref, u_ref, w0_ref, wl_ref, b_ref, o_ref, proj_ref):
        # x_ref   : (C_in_pad, HW_pad)         bf16  full batch element, resident
        # pt_ref  : (HW_pad, S2_pad)           bf16  pooling operator (transposed)
        # u_ref   : (S2_pad, tile_hw)          bf16  upsample operator tile
        # w0_ref  : (C_out_pad, C_in_pad)      bf16  identity-branch 1x1 conv weight
        # wl_ref  : (L, C_out_pad, C_in_pad)   bf16  per-level 1x1 conv weights
        # b_ref   : (C_out_pad, 1)             f32   bias
        # o_ref   : (C_out_pad, tile_hw)       f32   output tile (lane-dense)
        # proj_ref: (C_out_pad, S2_pad)        bf16  scratch: projected pooled feats
        q = pl.program_id(1)

        # Once per batch element: pool the full feature map and project each
        # pyramid level through its slice of the 1x1 conv (tiny matmuls).
        @pl.when(q == 0)
        def _():
            pooled = jnp.dot(x_ref[...], pt_ref[...],
                             preferred_element_type=jnp.float32)  # (C_in_pad, S2_pad)
            col = lax.broadcasted_iota(jnp.int32, (1, s2_pad), 1)
            proj = jnp.zeros((c_out_pad, s2_pad), jnp.float32)
            off = 0
            for lvl_idx, rows in enumerate(level_rows):            # static unroll
                sel = (col >= off) & (col < off + rows)
                lvl = jnp.where(sel, pooled, 0.0).astype(jnp.bfloat16)
                proj = proj + jnp.dot(wl_ref[lvl_idx], lvl,
                                      preferred_element_type=jnp.float32)
                off += rows
            proj_ref[...] = proj.astype(jnp.bfloat16)

        # Every HW tile: identity branch + upsampled projected pyramid + bias.
        start = pl.multiple_of(q * tile_hw, tile_hw)
        x_tile = x_ref[:, pl.ds(start, tile_hw)]                   # (C_in_pad, tile_hw)
        acc = jnp.dot(w0_ref[...], x_tile,
                      preferred_element_type=jnp.float32)          # (C_out_pad, tile_hw)
        acc = acc + jnp.dot(proj_ref[...], u_ref[...],
                            preferred_element_type=jnp.float32)
        o_ref[...] = (acc + b_ref[...]).astype(o_ref.dtype)

    return kernel


# ---------------------------------------------------------------------------
# Wrapper
# ---------------------------------------------------------------------------
def pyramid_pooling_forward(x_nchw, conv_w, conv_b, pool_sizes, tile_hw=None):
    """x_nchw: (N, C_in, H, W); conv_w: (C_out, C_in*(L+1), 1, 1); conv_b: (C_out,)."""
    N, C_in, H, W = x_nchw.shape
    n_levels = len(pool_sizes)
    C_out = conv_w.shape[0]
    assert conv_w.shape[1] == C_in * (n_levels + 1)
    HW = H * W
    S2 = int(sum(s * s for s in pool_sizes))

    # Channels only need sublane (8) padding in the NCHW layout; the lane dim
    # is spatial and is padded to a multiple of 128.
    C_in_pad = _round_up(C_in, 8)
    C_out_pad = _round_up(C_out, 8)
    S2_pad = _round_up(S2, 8)
    HW_pad = _round_up(HW, 128)

    if tile_hw is None:
        tile_hw = 128
        for t in (2048, 1024, 512, 256, 128):
            if HW_pad % t == 0:
                tile_hw = t
                break
    assert tile_hw % 128 == 0 and HW_pad % tile_hw == 0
    Q = HW_pad // tile_hw

    # NCHW -> (N, C_in_pad, HW_pad), bf16.  No transpose needed (layout kept).
    x_flat = x_nchw.reshape(N, C_in, HW).astype(jnp.bfloat16)
    x_pad = jnp.pad(x_flat, ((0, 0), (0, C_in_pad - C_in), (0, HW_pad - HW)))

    # Factored pool / upsample operators (padded, bf16).
    P_np, U_np = _build_factored_operators(H, W, pool_sizes)   # (S2,HW), (HW,S2)
    Pt_host = np.zeros((HW_pad, S2_pad), np.float32)
    Pt_host[:HW, :S2] = P_np.T
    Ut_host = np.zeros((S2_pad, HW_pad), np.float32)
    Ut_host[:S2, :HW] = U_np.T
    Pt = jnp.asarray(Pt_host, dtype=jnp.bfloat16)
    Ut = jnp.asarray(Ut_host, dtype=jnp.bfloat16)

    # 1x1 conv weight: channel blocks are [identity | level_0 | level_1 | ...].
    Wm = np.asarray(conv_w, np.float32).reshape(C_out, C_in * (n_levels + 1))
    W0_host = np.zeros((C_out_pad, C_in_pad), np.float32)
    W0_host[:C_out, :C_in] = Wm[:, :C_in]
    Wl_host = np.zeros((n_levels, C_out_pad, C_in_pad), np.float32)
    for s in range(n_levels):
        Wl_host[s, :C_out, :C_in] = Wm[:, (s + 1) * C_in:(s + 2) * C_in]
    W0 = jnp.asarray(W0_host, dtype=jnp.bfloat16)
    Wl = jnp.asarray(Wl_host, dtype=jnp.bfloat16)
    b_host = np.zeros((C_out_pad, 1), np.float32)
    b_host[:C_out, 0] = np.asarray(conv_b, np.float32)
    bias = jnp.asarray(b_host)

    level_rows = tuple(int(s * s) for s in pool_sizes)
    kernel = _make_ppm_kernel(level_rows, S2_pad, C_out_pad, tile_hw)

    # Explicit VMEM budget (resident x + operators + weights + double-buffered
    # U/output tiles + scratch), with headroom; kept well below physical VMEM.
    vmem_est = (2 * C_in_pad * HW_pad * 2          # x (bf16, double buffered)
                + 2 * HW_pad * S2_pad * 2          # P^T
                + 2 * S2_pad * tile_hw * 2         # U tiles (double buffered)
                + 2 * C_out_pad * C_in_pad * 2     # W0
                + 2 * n_levels * C_out_pad * C_in_pad * 2
                + 2 * C_out_pad * 4                # bias
                + 2 * C_out_pad * tile_hw * 4      # output tiles (double buffered)
                + C_out_pad * S2_pad * 2)          # proj scratch
    vmem_limit = int(min(max(2 * vmem_est, 16 * 1024 * 1024), 48 * 1024 * 1024))

    flops = 2 * N * (C_in_pad * HW_pad * S2_pad                    # pooling
                     + n_levels * C_out_pad * C_in_pad * S2_pad    # projection
                     + C_out_pad * S2_pad * HW_pad                 # upsample
                     + C_out_pad * C_in_pad * HW_pad)              # identity branch
    bytes_accessed = (x_pad.size * 2 + Pt.size * 2 + Ut.size * 2
                      + W0.size * 2 + Wl.size * 2 + bias.size * 4
                      + N * C_out_pad * HW_pad * 4)
    cost = pl.CostEstimate(flops=int(flops), transcendentals=0,
                           bytes_accessed=int(bytes_accessed))

    out_pad = pl.pallas_call(
        kernel,
        out_shape=jax.ShapeDtypeStruct((N, C_out_pad, HW_pad), jnp.float32),
        grid_spec=pltpu.PrefetchScalarGridSpec(
            num_scalar_prefetch=0,
            grid=(N, Q),
            in_specs=[
                pl.BlockSpec((None, C_in_pad, HW_pad), lambda n, q: (n, 0, 0)),  # x (per batch)
                pl.BlockSpec((HW_pad, S2_pad), lambda n, q: (0, 0)),             # P^T (const)
                pl.BlockSpec((S2_pad, tile_hw), lambda n, q: (0, q)),            # U tile
                pl.BlockSpec((C_out_pad, C_in_pad), lambda n, q: (0, 0)),        # W0 (const)
                pl.BlockSpec((n_levels, C_out_pad, C_in_pad),
                             lambda n, q: (0, 0, 0)),                            # level weights
                pl.BlockSpec((C_out_pad, 1), lambda n, q: (0, 0)),               # bias
            ],
            out_specs=pl.BlockSpec((None, C_out_pad, tile_hw),
                                   lambda n, q: (n, 0, q)),
            scratch_shapes=[pltpu.VMEM((C_out_pad, S2_pad), jnp.bfloat16)],
        ),
        compiler_params=pltpu.CompilerParams(
            dimension_semantics=("parallel", "arbitrary"),
            vmem_limit_bytes=vmem_limit),
        cost_estimate=cost,
    )(x_pad, Pt, Ut, W0, Wl, bias)

    # Slice off channel / spatial padding; layout already NCHW -> just reshape.
    return out_pad[:, :C_out, :HW].reshape(N, C_out, H, W)


# ---------------------------------------------------------------------------
# Independent reference (direct numpy adaptive-pool + bilinear gather, f64) —
# a different code path from the operator-matrix construction used by the
# kernel, so the check is not circular.
# ---------------------------------------------------------------------------
def _reference_forward(x_nchw, conv_w, conv_b, pool_sizes):
    x = np.asarray(x_nchw, np.float64)
    N, C, H, W = x.shape
    feats = [x]
    for s in pool_sizes:
        pooled = np.zeros((N, C, s, s), np.float64)
        for i in range(s):
            h0, h1 = (i * H) // s, -((-(i + 1) * H) // s)
            for j in range(s):
                c0, c1 = (j * W) // s, -((-(j + 1) * W) // s)
                pooled[:, :, i, j] = x[:, :, h0:h1, c0:c1].mean(axis=(2, 3))
        up = np.zeros((N, C, H, W), np.float64)
        sh, sw = s / H, s / W
        for oh in range(H):
            src_h = max((oh + 0.5) * sh - 0.5, 0.0)
            h0 = min(int(np.floor(src_h)), s - 1)
            h1 = min(h0 + 1, s - 1)
            lh = src_h - h0
            for ow in range(W):
                src_w = max((ow + 0.5) * sw - 0.5, 0.0)
                w0 = min(int(np.floor(src_w)), s - 1)
                w1 = min(w0 + 1, s - 1)
                lw = src_w - w0
                up[:, :, oh, ow] = ((1 - lh) * (1 - lw) * pooled[:, :, h0, w0]
                                    + (1 - lh) * lw * pooled[:, :, h0, w1]
                                    + lh * (1 - lw) * pooled[:, :, h1, w0]
                                    + lh * lw * pooled[:, :, h1, w1])
        feats.append(up)
    cat = np.concatenate(feats, axis=1)                       # (N, C*(L+1), H, W)
    Wm = np.asarray(conv_w, np.float64).reshape(conv_w.shape[0], -1)
    out = np.einsum("nchw,oc->nohw", cat, Wm)
    out = out + np.asarray(conv_b, np.float64)[None, :, None, None]
    return out


if __name__ == "__main__":
    N, C_in, H, W = 2, 4, 16, 16
    pool_sizes = (1, 2, 3)
    C_out = 8

    key = jax.random.PRNGKey(0)
    kx, kw, kb = jax.random.split(key, 3)
    x = jax.random.normal(kx, (N, C_in, H, W), dtype=jnp.float32)
    conv_w = jax.random.normal(kw, (C_out, C_in * (len(pool_sizes) + 1), 1, 1),
                               dtype=jnp.float32) * 0.1
    conv_b = jax.random.normal(kb, (C_out,), dtype=jnp.float32) * 0.1

    # tile_hw=128 exercises the multi-tile (Q=2) path at this small size.
    out = pyramid_pooling_forward(x, conv_w, conv_b, pool_sizes, tile_hw=128)
    out = jax.block_until_ready(out)

    ref = _reference_forward(x, conv_w, conv_b, pool_sizes)
    assert out.shape == (N, C_out, H, W)
    # bf16 operands with f32 accumulation -> loosened tolerance vs f64 reference.
    np.testing.assert_allclose(np.asarray(out, np.float64), ref,
                               rtol=3e-2, atol=3e-2)
    print("KERNEL_OK")
</pallas_src>

<mosaic_0001>
module attributes {stable_mosaic.version = 11 : i64} {
  func.func @kernel(%arg0: i32, %arg1: i32, %arg2: memref<1x8x256xbf16, #tpu.memory_space<vmem>>, %arg3: memref<256x16xbf16, #tpu.memory_space<vmem>>, %arg4: memref<16x128xbf16, #tpu.memory_space<vmem>>, %arg5: memref<8x8xbf16, #tpu.memory_space<vmem>>, %arg6: memref<3x8x8xbf16, #tpu.memory_space<vmem>>, %arg7: memref<8x1xf32, #tpu.memory_space<vmem>>, %arg8: memref<1x8x128xf32, #tpu.memory_space<vmem>>, %arg9: memref<8x16xbf16, #tpu.memory_space<vmem>>) attributes {dimension_semantics = [#tpu.dimension_semantics<parallel>, #tpu.dimension_semantics<arbitrary>], iteration_bounds = array<i64: 2, 2>, scalar_prefetch = 0 : i64, scratch_operands = 1 : i64, tpu.core_type = #tpu.core_type<tc>, window_params = [{transform_indices = @transform_0, window_bounds = array<i64: 1, 8, 256>}, {pipeline_mode = #tpu.pipeline_mode<synchronous>, transform_indices = @transform_1, window_bounds = array<i64: 256, 16>}, {transform_indices = @transform_2, window_bounds = array<i64: 16, 128>}, {pipeline_mode = #tpu.pipeline_mode<synchronous>, transform_indices = @transform_3, window_bounds = array<i64: 8, 8>}, {pipeline_mode = #tpu.pipeline_mode<synchronous>, transform_indices = @transform_4, window_bounds = array<i64: 3, 8, 8>}, {pipeline_mode = #tpu.pipeline_mode<synchronous>, transform_indices = @transform_5, window_bounds = array<i64: 8, 1>}, {transform_indices = @transform_6, window_bounds = array<i64: 1, 8, 128>}]} {
    %c0_i32 = arith.constant 0 : i32
    %0 = arith.cmpi eq, %arg1, %c0_i32 : i32
    %1 = arith.extui %0 : i1 to i32
    %c0_i32_0 = arith.constant 0 : i32
    %2 = arith.cmpi ne, %1, %c0_i32_0 : i32
    scf.if %2 {
      %c0_14 = arith.constant 0 : index
      %c0_15 = arith.constant 0 : index
      %c0_16 = arith.constant 0 : index
      %20 = vector.load %arg2[%c0_14, %c0_15, %c0_16] : memref<1x8x256xbf16, #tpu.memory_space<vmem>>, vector<1x8x256xbf16>
      %21 = vector.shape_cast %20 : vector<1x8x256xbf16> to vector<8x256xbf16>
      %c0_17 = arith.constant 0 : index
      %c0_18 = arith.constant 0 : index
      %22 = vector.load %arg3[%c0_17, %c0_18] : memref<256x16xbf16, #tpu.memory_space<vmem>>, vector<256x16xbf16>
      %cst_19 = arith.constant dense<0.000000e+00> : vector<8x16xf32>
      %23 = tpu.matmul %21, %22, %cst_19 {dimension_numbers = #tpu.dot_dimension_numbers<[1], [0], [0], [1], [0, 0, 1, 1], [], []>} : vector<8x256xbf16>, vector<256x16xbf16>, vector<8x16xf32> -> vector<8x16xf32>
      %24 = tpu.iota {dimensions = array<i32: 1>} : vector<1x16xi32>
      %cst_20 = arith.constant 0.000000e+00 : f32
      %25 = vector.broadcast %cst_20 : f32 to vector<8x16xf32>
      %c0_i32_21 = arith.constant 0 : i32
      %26 = vector.broadcast %c0_i32_21 : i32 to vector<1x16xi32>
      %27 = arith.cmpi sge, %24, %26 : vector<1x16xi32>
      %c1_i32 = arith.constant 1 : i32
      %28 = vector.broadcast %c1_i32 : i32 to vector<1x16xi32>
      %29 = arith.cmpi slt, %24, %28 : vector<1x16xi32>
      %30 = arith.andi %27, %29 : vector<1x16xi1>
      %cst_22 = arith.constant 0.000000e+00 : f32
      %31 = vector.shape_cast %30 : vector<1x16xi1> to vector<1x16xi1>
      %32 = vector.broadcast %31 : vector<1x16xi1> to vector<8x16xi1>
      %33 = vector.broadcast %cst_22 : f32 to vector<8x16xf32>
      %34 = arith.select %32, %23, %33 : vector<8x16xi1>, vector<8x16xf32>
      %35 = arith.truncf %34 : vector<8x16xf32> to vector<8x16xbf16>
      %c0_23 = arith.constant 0 : index
      %c0_24 = arith.constant 0 : index
      %c0_25 = arith.constant 0 : index
      %36 = vector.load %arg6[%c0_23, %c0_24, %c0_25] : memref<3x8x8xbf16, #tpu.memory_space<vmem>>, vector<1x8x8xbf16>
      %37 = vector.shape_cast %36 : vector<1x8x8xbf16> to vector<8x8xbf16>
      %cst_26 = arith.constant dense<0.000000e+00> : vector<8x16xf32>
      %38 = tpu.matmul %37, %35, %cst_26 {dimension_numbers = #tpu.dot_dimension_numbers<[1], [0], [0], [1], [0, 0, 1, 1], [], []>} : vector<8x8xbf16>, vector<8x16xbf16>, vector<8x16xf32> -> vector<8x16xf32>
      %39 = arith.addf %25, %38 : vector<8x16xf32>
      %c1_i32_27 = arith.constant 1 : i32
      %40 = vector.broadcast %c1_i32_27 : i32 to vector<1x16xi32>
      %41 = arith.cmpi sge, %24, %40 : vector<1x16xi32>
      %c5_i32 = arith.constant 5 : i32
      %42 = vector.broadcast %c5_i32 : i32 to vector<1x16xi32>
      %43 = arith.cmpi slt, %24, %42 : vector<1x16xi32>
      %44 = arith.andi %41, %43 : vector<1x16xi1>
      %cst_28 = arith.constant 0.000000e+00 : f32
      %45 = vector.shape_cast %44 : vector<1x16xi1> to vector<1x16xi1>
      %46 = vector.broadcast %45 : vector<1x16xi1> to vector<8x16xi1>
      %47 = vector.broadcast %cst_28 : f32 to vector<8x16xf32>
      %48 = arith.select %46, %23, %47 : vector<8x16xi1>, vector<8x16xf32>
      %49 = arith.truncf %48 : vector<8x16xf32> to vector<8x16xbf16>
      %c1 = arith.constant 1 : index
      %c0_29 = arith.constant 0 : index
      %c0_30 = arith.constant 0 : index
      %50 = vector.load %arg6[%c1, %c0_29, %c0_30] : memref<3x8x8xbf16, #tpu.memory_space<vmem>>, vector<1x8x8xbf16>
      %51 = vector.shape_cast %50 : vector<1x8x8xbf16> to vector<8x8xbf16>
      %cst_31 = arith.constant dense<0.000000e+00> : vector<8x16xf32>
      %52 = tpu.matmul %51, %49, %cst_31 {dimension_numbers = #tpu.dot_dimension_numbers<[1], [0], [0], [1], [0, 0, 1, 1], [], []>} : vector<8x8xbf16>, vector<8x16xbf16>, vector<8x16xf32> -> vector<8x16xf32>
      %53 = arith.addf %39, %52 : vector<8x16xf32>
      %c5_i32_32 = arith.constant 5 : i32
      %54 = vector.broadcast %c5_i32_32 : i32 to vector<1x16xi32>
      %55 = arith.cmpi sge, %24, %54 : vector<1x16xi32>
      %c14_i32 = arith.constant 14 : i32
      %56 = vector.broadcast %c14_i32 : i32 to vector<1x16xi32>
      %57 = arith.cmpi slt, %24, %56 : vector<1x16xi32>
      %58 = arith.andi %55, %57 : vector<1x16xi1>
      %cst_33 = arith.constant 0.000000e+00 : f32
      %59 = vector.shape_cast %58 : vector<1x16xi1> to vector<1x16xi1>
      %60 = vector.broadcast %59 : vector<1x16xi1> to vector<8x16xi1>
      %61 = vector.broadcast %cst_33 : f32 to vector<8x16xf32>
      %62 = arith.select %60, %23, %61 : vector<8x16xi1>, vector<8x16xf32>
      %63 = arith.truncf %62 : vector<8x16xf32> to vector<8x16xbf16>
      %c2 = arith.constant 2 : index
      %c0_34 = arith.constant 0 : index
      %c0_35 = arith.constant 0 : index
      %64 = vector.load %arg6[%c2, %c0_34, %c0_35] : memref<3x8x8xbf16, #tpu.memory_space<vmem>>, vector<1x8x8xbf16>
      %65 = vector.shape_cast %64 : vector<1x8x8xbf16> to vector<8x8xbf16>
      %cst_36 = arith.constant dense<0.000000e+00> : vector<8x16xf32>
      %66 = tpu.matmul %65, %63, %cst_36 {dimension_numbers = #tpu.dot_dimension_numbers<[1], [0], [0], [1], [0, 0, 1, 1], [], []>} : vector<8x8xbf16>, vector<8x16xbf16>, vector<8x16xf32> -> vector<8x16xf32>
      %67 = arith.addf %53, %66 : vector<8x16xf32>
      %68 = arith.truncf %67 : vector<8x16xf32> to vector<8x16xbf16>
      %c0_37 = arith.constant 0 : index
      %c0_38 = arith.constant 0 : index
      %69 = vector.load %arg9[%c0_37, %c0_38] : memref<8x16xbf16, #tpu.memory_space<vmem>>, vector<8x16xbf16>
      tpu.vector_store %arg9[%c0_37, %c0_38], %68 {strides = array<i32>} : memref<8x16xbf16, #tpu.memory_space<vmem>>, vector<8x16xbf16>,
    } else {
    }
    %c128_i32 = arith.constant 128 : i32
    %3 = arith.muli %arg1, %c128_i32 : i32
    %4 = tpu.assume_multiple %3, 128 : i32
    %c0 = arith.constant 0 : index
    %c0_1 = arith.constant 0 : index
    %5 = arith.index_cast %4 : i32 to index
    %6 = vector.load %arg2[%c0, %c0_1, %5] : memref<1x8x256xbf16, #tpu.memory_space<vmem>>, vector<1x8x128xbf16>
    %7 = vector.shape_cast %6 : vector<1x8x128xbf16> to vector<8x128xbf16>
    %c0_2 = arith.constant 0 : index
    %c0_3 = arith.constant 0 : index
    %8 = vector.load %arg5[%c0_2, %c0_3] : memref<8x8xbf16, #tpu.memory_space<vmem>>, vector<8x8xbf16>
    %cst = arith.constant dense<0.000000e+00> : vector<8x128xf32>
    %9 = tpu.matmul %8, %7, %cst {dimension_numbers = #tpu.dot_dimension_numbers<[1], [0], [0], [1], [0, 0, 1, 1], [], []>} : vector<8x8xbf16>, vector<8x128xbf16>, vector<8x128xf32> -> vector<8x128xf32>
    %c0_4 = arith.constant 0 : index
    %c0_5 = arith.constant 0 : index
    %10 = vector.load %arg9[%c0_4, %c0_5] : memref<8x16xbf16, #tpu.memory_space<vmem>>, vector<8x16xbf16>
    %c0_6 = arith.constant 0 : index
    %c0_7 = arith.constant 0 : index
    %11 = vector.load %arg4[%c0_6, %c0_7] : memref<16x128xbf16, #tpu.memory_space<vmem>>, vector<16x128xbf16>
    %cst_8 = arith.constant dense<0.000000e+00> : vector<8x128xf32>
    %12 = tpu.matmul %10, %11, %cst_8 {dimension_numbers = #tpu.dot_dimension_numbers<[1], [0], [0], [1], [0, 0, 1, 1], [], []>} : vector<8x16xbf16>, vector<16x128xbf16>, vector<8x128xf32> -> vector<8x128xf32>
    %13 = arith.addf %9, %12 : vector<8x128xf32>
    %c0_9 = arith.constant 0 : index
    %c0_10 = arith.constant 0 : index
    %14 = vector.load %arg7[%c0_9, %c0_10] : memref<8x1xf32, #tpu.memory_space<vmem>>, vector<8x1xf32>
    %15 = vector.broadcast %14 : vector<8x1xf32> to vector<8x128xf32>
    %16 = arith.addf %13, %15 : vector<8x128xf32>
    %c0_11 = arith.constant 0 : index
    %c0_12 = arith.constant 0 : index
    %c0_13 = arith.constant 0 : index
    %17 = vector.load %arg8[%c0_11, %c0_12, %c0_13] : memref<1x8x128xf32, #tpu.memory_space<vmem>>, vector<1x8x128xf32>
    %18 = vector.shape_cast %17 : vector<1x8x128xf32> to vector<8x128xf32>
    %19 = vector.shape_cast %16 : vector<8x128xf32> to vector<1x8x128xf32>
    tpu.vector_store %arg8[%c0_11, %c0_12, %c0_13], %19 {strides = array<i32>} : memref<1x8x128xf32, #tpu.memory_space<vmem>>, vector<1x8x128xf32>,
    return
  }
  func.func @transform_0(%arg0: i32, %arg1: i32) -> (i32, i32, i32) {
    %c0_i32 = arith.constant 0 : i32
    %c0_i32_0 = arith.constant 0 : i32
    %c0_i32_1 = arith.constant 0 : i32
    return %arg0, %c0_i32, %c0_i32_0 : i32, i32, i32
  }
  func.func @transform_1(%arg0: i32, %arg1: i32) -> (i32, i32) {
    %c0_i32 = arith.constant 0 : i32
    %c0_i32_0 = arith.constant 0 : i32
    %c0_i32_1 = arith.constant 0 : i32
    return %c0_i32, %c0_i32_0 : i32, i32
  }
  func.func @transform_2(%arg0: i32, %arg1: i32) -> (i32, i32) {
    %c0_i32 = arith.constant 0 : i32
    %c0_i32_0 = arith.constant 0 : i32
    return %c0_i32, %arg1 : i32, i32
  }
  func.func @transform_3(%arg0: i32, %arg1: i32) -> (i32, i32) {
    %c0_i32 = arith.constant 0 : i32
    %c0_i32_0 = arith.constant 0 : i32
    %c0_i32_1 = arith.constant 0 : i32
    return %c0_i32, %c0_i32_0 : i32, i32
  }
  func.func @transform_4(%arg0: i32, %arg1: i32) -> (i32, i32, i32) {
    %c0_i32 = arith.constant 0 : i32
    %c0_i32_0 = arith.constant 0 : i32
    %c0_i32_1 = arith.constant 0 : i32
    %c0_i32_2 = arith.constant 0 : i32
    return %c0_i32, %c0_i32_0, %c0_i32_1 : i32, i32, i32
  }
  func.func @transform_5(%arg0: i32, %arg1: i32) -> (i32, i32) {
    %c0_i32 = arith.constant 0 : i32
    %c0_i32_0 = arith.constant 0 : i32
    %c0_i32_1 = arith.constant 0 : i32
    return %c0_i32, %c0_i32_0 : i32, i32
  }
  func.func @transform_6(%arg0: i32, %arg1: i32) -> (i32, i32, i32) {
    %c0_i32 = arith.constant 0 : i32
    %c0_i32_0 = arith.constant 0 : i32
    return %arg0, %c0_i32, %arg1 : i32, i32, i32
  }
}

</mosaic_0001>

<llo_original>
// kernel: tpu_custom_call.1
$region0: #{tpu_custom_call.1}
  #allocation0 [shape = 'u32[]', space=smem, size = 0x4, offset = 0x4, fixed_abs, tag = 'smem constant byte address 0x4 - core index']
  #allocation1 [shape = 'u32[144,128]{1,0:T(1,128)}', space=vmem, size = 0x12000, scoped, tag = 'internal scratch']
  #allocation2 [shape = 'bf16[8,16]{1,0:T(8,128)(2,1)}', space=vmem, size = 0x800, scoped, tag = 'scratch operand']
  %s0 = inlined_call_operand.vmem [shape: bf16[2,8,256], index: 0, kind: input, shape index: {}]
  %s1 = inlined_call_operand.vmem [shape: bf16[256,16], index: 1, kind: input, shape index: {}]
  %s2 = inlined_call_operand.vmem [shape: bf16[16,256], index: 2, kind: input, shape index: {}]
  %s3 = inlined_call_operand.vmem [shape: bf16[8,8], index: 3, kind: input, shape index: {}]
  %s4 = inlined_call_operand.vmem [shape: bf16[3,8,8], index: 4, kind: input, shape index: {}]
  %s5 = inlined_call_operand.vmem [shape: f32[8,1], index: 5, kind: input, shape index: {}]
  %s6 = inlined_call_operand.hbm [shape: f32[2,8,256], index: 6, kind: output, shape index: {}]
  %s7 = sld [smem:[#allocation0]]
  $region102: #{tpu_custom_call.1} parent=0
    _
  %s9 = ssub.s32 1, %s7
  %s10 = scalar_select 0, %s9, %s7
  $region1: #{tpu_custom_call.1} parent=0
    #allocation3 [shape = 'u8[8192]{0}', space=vmem, size = 0x2000, scoped, tag = 'input window, operand 2']
    #allocation4 [shape = 'u8[8192]{0}', space=vmem, size = 0x2000, scoped, tag = 'output window, operand 0']
    #allocation5 [shape = 's32[2]{0}', space=sflag, size = 0x8, scoped, tag = 'scoped memory for tpu_custom_call.1']
    %11 = vsyncpa [#allocation5], 0
    %s12 = scalar_lea.sflag [#allocation5], 1
    %13 = vsyncpa %s12, 0
    loop: start=0, step=1, limit=6
    $region2: #{tpu_custom_call.1} parent=1 // loop_pre_header
      _
    $region3: #{tpu_custom_call.1} parent=1 // loop_header
      %s15 = sphi 0, %s19
      %p16 = scmp.ge.s32.totalorder %s15, 6
      %s22 = sphi 0, %s34
      %s23 = sphi 0, %s30
      %s24 = sphi 0, %s22
      %s25 = sphi 0, %s23
      %s26 = sphi 0, %s24
      %s27 = sphi 0, %s25
      %s37 = sphi 0, %s39
      %s40 = sphi 0, %s37
      %s41 = sphi 0, %s40
      %s57 = sphi 0, %s41
      %s61 = sphi 0, %s61
      %s63 = sphi 0, %s61
      %s64 = sphi 0, %s63
      %s78 = sphi 0, %s64
      %s84 = sphi 0, %s86
      %s87 = sphi 0, %s84
      %s88 = sphi 0, %s87
      %s104 = sphi 0, %s88
      %s108 = sphi 0, %s108
      %s110 = sphi 0, %s108
      %s111 = sphi 0, %s110
      %s125 = sphi 0, %s111
      %s129 = sphi 0, %s129
      %s131 = sphi 0, %s129
      %s132 = sphi 0, %s131
      %s146 = sphi 0, %s132
      %s150 = sphi 0, %s150
      %s152 = sphi 0, %s150
      %s153 = sphi 0, %s152
      %s167 = sphi 0, %s153
      %s175 = sphi 0, %s177
      %s178 = sphi 0, %s175
      %s179 = sphi 0, %s178
      %s195 = sphi 0, %s179
    $region4: #{tpu_custom_call.1} parent=1 // loop_header_branch
      %18 = sbr.rel (%p16) target = $region8
    $region5: #{tpu_custom_call.1} parent=1 // loop_body
      %s20 = ssub.s32 %s15, 1
      %s21 = ssub.s32 %s15, 2
      %s28 = sadd.s32 1, %s23
      %p29 = scmp.ge.s32.totalorder %s28, 2
      %s30 = scalar_select %p29, 0, %s28
      %s31 = sadd.s32 1, %s22
      %s32 = scalar_select %p29, %s31, %s22
      %p33 = scmp.ge.s32.totalorder %s32, 2
      %s34 = scalar_select %p33, 0, %s32
      %s35 = ssub.s32 %s22, %s34
      %p36 = scmp.eq.s32.totalorder %s35, 0
      %s38 = sadd.s32 %s37, 1
      %s39 = scalar_select %p36, %s37, %s38
      %p42 = pneg %p36
      %p43 = scmp.eq.s32.totalorder %s15, 3
      %p44 = por %p42, %p43
      %p45 = scmp.ne.s32.totalorder %s37, %s40
      %p46 = scmp.eq.s32.totalorder %s15, 0
      %p47 = por %p45, %p46
      %p48 = scmp.ne.s32.totalorder %s37, %s40
      %p49 = scmp.eq.s32.totalorder %s20, 3
      %p50 = por %p48, %p49
      %p51 = scmp.ne.s32.totalorder %s40, %s41
      %p52 = scmp.eq.s32.totalorder %s20, 0
      %p53 = por %p51, %p52
      %p54 = scmp.ne.s32.totalorder %s40, %s41
      %p55 = scmp.eq.s32.totalorder %s21, 3
      %p56 = por %p54, %p55
      %p58 = scmp.ne.s32.totalorder %s41, %s57
      %p59 = scmp.eq.s32.totalorder %s21, 0
      %p60 = por %p58, %p59
      %s62 = sadd.s32 %s61, 1
      %p65 = scmp.eq.s32.totalorder %s15, 3
      %p66 = scmp.ne.s32.totalorder %s61, %s63
      %p67 = scmp.eq.s32.totalorder %s15, 0
      %p68 = por %p66, %p67
      %p69 = scmp.ne.s32.totalorder %s61, %s63
      %p70 = scmp.eq.s32.totalorder %s20, 3
      %p71 = por %p69, %p70
      %p72 = scmp.ne.s32.totalorder %s63, %s64
      %p73 = scmp.eq.s32.totalorder %s20, 0
      %p74 = por %p72, %p73
      %p75 = scmp.ne.s32.totalorder %s63, %s64
      %p76 = scmp.eq.s32.totalorder %s21, 3
      %p77 = por %p75, %p76
      %p79 = scmp.ne.s32.totalorder %s64, %s78
      %p80 = scmp.eq.s32.totalorder %s21, 0
      %p81 = por %p79, %p80
      %s82 = ssub.s32 %s23, %s30
      %p83 = scmp.eq.s32.totalorder %s82, 0
      %s85 = sadd.s32 %s84, 1
      %s86 = scalar_select %p83, %s84, %s85
      %p89 = pneg %p83
      %p90 = scmp.eq.s32.totalorder %s15, 3
      %p91 = por %p89, %p90
      %p92 = scmp.ne.s32.totalorder %s84, %s87
      %p93 = scmp.eq.s32.totalorder %s15, 0
      %p94 = por %p92, %p93
      %p95 = scmp.ne.s32.totalorder %s84, %s87
      %p96 = scmp.eq.s32.totalorder %s20, 3
      %p97 = por %p95, %p96
      %p98 = scmp.ne.s32.totalorder %s87, %s88
      %p99 = scmp.eq.s32.totalorder %s20, 0
      %p100 = por %p98, %p99
      %p101 = scmp.ne.s32.totalorder %s87, %s88
      %p102 = scmp.eq.s32.totalorder %s21, 3
      %p103 = por %p101, %p102
      %p105 = scmp.ne.s32.totalorder %s88, %s104
      %p106 = scmp.eq.s32.totalorder %s21, 0
      %p107 = por %p105, %p106
      %s109 = sadd.s32 %s108, 1
      %p112 = scmp.eq.s32.totalorder %s15, 3
      %p113 = scmp.ne.s32.totalorder %s108, %s110
      %p114 = scmp.eq.s32.totalorder %s15, 0
      %p115 = por %p113, %p114
      %p116 = scmp.ne.s32.totalorder %s108, %s110
      %p117 = scmp.eq.s32.totalorder %s20, 3
      %p118 = por %p116, %p117
      %p119 = scmp.ne.s32.totalorder %s110, %s111
      %p120 = scmp.eq.s32.totalorder %s20, 0
      %p121 = por %p119, %p120
      %p122 = scmp.ne.s32.totalorder %s110, %s111
      %p123 = scmp.eq.s32.totalorder %s21, 3
      %p124 = por %p122, %p123
      %p126 = scmp.ne.s32.totalorder %s111, %s125
      %p127 = scmp.eq.s32.totalorder %s21, 0
      %p128 = por %p126, %p127
      %s130 = sadd.s32 %s129, 1
      %p133 = scmp.eq.s32.totalorder %s15, 3
      %p134 = scmp.ne.s32.totalorder %s129, %s131
      %p135 = scmp.eq.s32.totalorder %s15, 0
      %p136 = por %p134, %p135
      %p137 = scmp.ne.s32.totalorder %s129, %s131
      %p138 = scmp.eq.s32.totalorder %s20, 3
      %p139 = por %p137, %p138
      %p140 = scmp.ne.s32.totalorder %s131, %s132
      %p141 = scmp.eq.s32.totalorder %s20, 0
      %p142 = por %p140, %p141
      %p143 = scmp.ne.s32.totalorder %s131, %s132
      %p144 = scmp.eq.s32.totalorder %s21, 3
      %p145 = por %p143, %p144
      %p147 = scmp.ne.s32.totalorder %s132, %s146
      %p148 = scmp.eq.s32.totalorder %s21, 0
      %p149 = por %p147, %p148
      %s151 = sadd.s32 %s150, 1
      %p154 = scmp.eq.s32.totalorder %s15, 3
      %p155 = scmp.ne.s32.totalorder %s150, %s152
      %p156 = scmp.eq.s32.totalorder %s15, 0
      %p157 = por %p155, %p156
      %p158 = scmp.ne.s32.totalorder %s150, %s152
      %p159 = scmp.eq.s32.totalorder %s20, 3
      %p160 = por %p158, %p159
      %p161 = scmp.ne.s32.totalorder %s152, %s153
      %p162 = scmp.eq.s32.totalorder %s20, 0
      %p163 = por %p161, %p162
      %p164 = scmp.ne.s32.totalorder %s152, %s153
      %p165 = scmp.eq.s32.totalorder %s21, 3
      %p166 = por %p164, %p165
      %p168 = scmp.ne.s32.totalorder %s153, %s167
      %p169 = scmp.eq.s32.totalorder %s21, 0
      %p170 = por %p168, %p169
      %s171 = ssub.s32 %s22, %s34
      %s172 = ssub.s32 %s23, %s30
      %s173 = sor.u32 %s171, %s172
      %p174 = scmp.eq.s32.totalorder %s173, 0
      %s176 = sadd.s32 %s175, 1
      %s177 = scalar_select %p174, %s175, %s176
      %p180 = pneg %p174
      %p181 = scmp.eq.s32.totalorder %s15, 3
      %p182 = por %p180, %p181
      %p183 = scmp.ne.s32.totalorder %s175, %s178
      %p184 = scmp.eq.s32.totalorder %s15, 0
      %p185 = por %p183, %p184
      %p186 = scmp.ne.s32.totalorder %s175, %s178
      %p187 = scmp.eq.s32.totalorder %s20, 3
      %p188 = por %p186, %p187
      %p189 = scmp.ne.s32.totalorder %s178, %s179
      %p190 = scmp.eq.s32.totalorder %s20, 0
      %p191 = por %p189, %p190
      %p192 = scmp.ne.s32.totalorder %s178, %s179
      %p193 = scmp.eq.s32.totalorder %s21, 3
      %p194 = por %p192, %p193
      %p196 = scmp.ne.s32.totalorder %s179, %s195
      %p197 = scmp.eq.s32.totalorder %s21, 0
      %p198 = por %p196, %p197
      %p199 = scmp.le.s32.totalorder 1, %s15
      %p200 = scmp.lt.s32.totalorder %s15, 5
      %p201 = pnand %p199, %p200
      %p202 = pneg %p201
      // Predicated region
      $region9: #{tpu_custom_call.1} parent=5 // pred_check
        _
      $region10: #{tpu_custom_call.1} parent=5 // pred_check_branch
        %204 = sbr.rel (%p201) target = $region12
      $region11: #{tpu_custom_call.1} parent=5 // pred_region
        %s205 = ssub.s32 %s15, 1
        // Predicated region
        $region13: #{tpu_custom_call.1} parent=11 // pred_check
          %p206 = pneg %p74
        $region14: #{tpu_custom_call.1} parent=11 // pred_check_branch
          %208 = sbr.rel (%p206) target = $region16
        $region15: #{tpu_custom_call.1} parent=11 // pred_region
          _
        $region16: #{tpu_custom_call.1} parent=11 // pred_fallthru
          _
        // Predicated region
        $region17: #{tpu_custom_call.1} parent=11 // pred_check
          %p209 = pneg %p121
        $region18: #{tpu_custom_call.1} parent=11 // pred_check_branch
          %211 = sbr.rel (%p209) target = $region20
        $region19: #{tpu_custom_call.1} parent=11 // pred_region
          _
        $region20: #{tpu_custom_call.1} parent=11 // pred_fallthru
          _
        // Predicated region
        $region21: #{tpu_custom_call.1} parent=11 // pred_check
          %p212 = pneg %p142
        $region22: #{tpu_custom_call.1} parent=11 // pred_check_branch
          %214 = sbr.rel (%p212) target = $region24
        $region23: #{tpu_custom_call.1} parent=11 // pred_region
          _
        $region24: #{tpu_custom_call.1} parent=11 // pred_fallthru
          _
        // Predicated region
        $region25: #{tpu_custom_call.1} parent=11 // pred_check
          %p215 = pneg %p163
        $region26: #{tpu_custom_call.1} parent=11 // pred_check_branch
          %217 = sbr.rel (%p215) target = $region28
        $region27: #{tpu_custom_call.1} parent=11 // pred_region
          _
        $region28: #{tpu_custom_call.1} parent=11 // pred_fallthru
          _
      $region12: #{tpu_custom_call.1} parent=5 // pred_fallthru
        _
      %p218 = scmp.lt.s32.totalorder %s15, 4
      // Predicated region
      $region29: #{tpu_custom_call.1} parent=5 // pred_check
        %p219 = pneg %p218
      $region30: #{tpu_custom_call.1} parent=5 // pred_check_branch
        %221 = sbr.rel (%p219) target = $region32
      $region31: #{tpu_custom_call.1} parent=5 // pred_region
        // Predicated region
        $region33: #{tpu_custom_call.1} parent=31 // pred_check
          %p222 = pneg %p47
        $region34: #{tpu_custom_call.1} parent=31 // pred_check_branch
          %224 = sbr.rel (%p222) target = $region36
        $region35: #{tpu_custom_call.1} parent=31 // pred_region
          %p225 = scmp.lt.s32.totalorder %s22, 1
          %s226 = scalar_select %p225, %s22, 1
          %s227 = smul.addr %s226, 2
          %s228 = smul.addr %s227, 4
          %s229 = scalar_lea.vmem %s0, %s228
        $region36: #{tpu_custom_call.1} parent=31 // pred_fallthru
          _
        // Predicated region
        $region37: #{tpu_custom_call.1} parent=31 // pred_check
          %p230 = pneg %p94
        $region38: #{tpu_custom_call.1} parent=31 // pred_check_branch
          %232 = sbr.rel (%p230) target = $region40
        $region39: #{tpu_custom_call.1} parent=31 // pred_region
          %s233 = sand.u32 %s84, 1
          %s234 = sand.u32 %s84, 1
          %s235 = smul.addr %s234, 8
          %s236 = scalar_lea.vmem [#allocation3], %s235
          %s237 = smul.addr %s23, 4
          %s238 = scalar_lea.vmem %s2, %s237
          // Predicated region
          $region41: #{tpu_custom_call.1} parent=39 // pred_check
            _
          $region42: #{tpu_custom_call.1} parent=39 // pred_check_branch
            %240 = sbr.rel (0) target = $region44
          $region43: #{tpu_custom_call.1} parent=39 // pred_region
            // Predicated region
            $region45: #{tpu_custom_call.1} parent=43 // pred_check
              _
            $region46: #{tpu_custom_call.1} parent=43 // pred_check_branch
              %242 = sbr.rel target = $region48
            $region47: #{tpu_custom_call.1} parent=43 // pred_region
              // Predicated region
              $region60: #{tpu_custom_call.1} parent=47 // pred_check
                _
              $region61: #{tpu_custom_call.1} parent=47 // pred_check_branch
                %259 = sbr.rel (0) target = $region63
              $region62: #{tpu_custom_call.1} parent=47 // pred_region
                loop: start=0, step=1, limit=1
                $region64: #{tpu_custom_call.1} parent=62 // loop_pre_header
                  _
                $region65: #{tpu_custom_call.1} parent=62 // loop_header
                  %s261 = sphi 0, %s265
                  %p262 = scmp.ge.s32.totalorder %s261, 1
                  %s266 = sphi %s238, %s238
                  %s267 = sphi %s236, %s236
                $region66: #{tpu_custom_call.1} parent=62 // loop_header_branch
                  %264 = sbr.rel (%p262) target = $region70
                $region67: #{tpu_custom_call.1} parent=62 // loop_body
                  _
                $region68: #{tpu_custom_call.1} parent=62 // loop_footer
                  %s265 = sadd.s32 1, %s261
                $region69: #{tpu_custom_call.1} parent=62 // loop_footer_branch
                  %260 = sbr.rel target = $region65
                $region70: #{tpu_custom_call.1} parent=62 // loop_exit
                  _
                loop: start=0, step=1, limit=1
                $region71: #{tpu_custom_call.1} parent=62 // loop_pre_header
                  _
                $region72: #{tpu_custom_call.1} parent=62 // loop_header
                  %s270 = sphi 0, %s274
                  %p271 = scmp.ge.s32.totalorder %s270, 1
                  %s275 = sphi %s238, %s238
                  %s276 = sphi %s236, %s236
                $region73: #{tpu_custom_call.1} parent=62 // loop_header_branch
                  %273 = sbr.rel (%p271) target = $region77
                $region74: #{tpu_custom_call.1} parent=62 // loop_body
                  %v277 = vld [vmem:[%s275] sm:$0xf]
                  %278 = vst [vmem:[%s276] sm:$0xf] %v277
                  %v279 = vld [vmem:[%s275 + $0x8] sm:$0xf]
                  %280 = vst [vmem:[%s276 + $0x4] sm:$0xf] %v279
                $region75: #{tpu_custom_call.1} parent=62 // loop_footer
                  %s274 = sadd.s32 1, %s270
                $region76: #{tpu_custom_call.1} parent=62 // loop_footer_branch
                  %269 = sbr.rel target = $region72
                $region77: #{tpu_custom_call.1} parent=62 // loop_exit
                  _
              $region63: #{tpu_custom_call.1} parent=47 // pred_fallthru
                _
            $region48: #{tpu_custom_call.1} parent=43 // pred_fallthru
              _
            // Predicated region
            $region49: #{tpu_custom_call.1} parent=43 // pred_check
              _
            $region50: #{tpu_custom_call.1} parent=43 // pred_check_branch
              %244 = sbr.rel (0) target = $region52
            $region51: #{tpu_custom_call.1} parent=43 // pred_region
              loop: start=0, step=1, limit=1
              $region53: #{tpu_custom_call.1} parent=51 // loop_pre_header
                _
              $region54: #{tpu_custom_call.1} parent=51 // loop_header
                %s247 = sphi 0, %s251
                %p248 = scmp.ge.s32.totalorder %s247, 1
                %s252 = sphi %s238, %s238
                %s253 = sphi %s236, %s236
              $region55: #{tpu_custom_call.1} parent=51 // loop_header_branch
                %250 = sbr.rel (%p248) target = $region59
              $region56: #{tpu_custom_call.1} parent=51 // loop_body
                %v254 = vld [vmem:[%s252] sm:$0xf]
                %255 = vst [vmem:[%s253] sm:$0xf] %v254
                %v256 = vld [vmem:[%s252 + $0x8] sm:$0xf]
                %257 = vst [vmem:[%s253 + $0x4] sm:$0xf] %v256
              $region57: #{tpu_custom_call.1} parent=51 // loop_footer
                %s251 = sadd.s32 1, %s247
              $region58: #{tpu_custom_call.1} parent=51 // loop_footer_branch
                %246 = sbr.rel target = $region54
              $region59: #{tpu_custom_call.1} parent=51 // loop_exit
                _
            $region52: #{tpu_custom_call.1} parent=43 // pred_fallthru
              _
          $region44: #{tpu_custom_call.1} parent=39 // pred_fallthru
            _
          %281 = vnop
        $region40: #{tpu_custom_call.1} parent=31 // pred_fallthru
          _
      $region32: #{tpu_custom_call.1} parent=5 // pred_fallthru
        _
      %p282 = scmp.le.s32.totalorder 1, %s15
      %p283 = scmp.lt.s32.totalorder %s15, 5
      %p284 = pnand %p282, %p283
      %p285 = pneg %p284
      // Predicated region
      $region78: #{tpu_custom_call.1} parent=5 // pred_check
        _
      $region79: #{tpu_custom_call.1} parent=5 // pred_check_branch
        %287 = sbr.rel (%p284) target = $region81
      $region80: #{tpu_custom_call.1} parent=5 // pred_region
        %s288 = ssub.s32 %s15, 1
        %s289 = sand.u32 %s87, 1
        %s290 = sand.u32 %s87, 1
        %s291 = smul.addr %s290, 8
        %s292 = scalar_lea.vmem [#allocation3], %s291
        // Predicated region
        $region82: #{tpu_custom_call.1} parent=80 // pred_check
          %p293 = pneg %p100
        $region83: #{tpu_custom_call.1} parent=80 // pred_check_branch
          %295 = sbr.rel (%p293) target = $region85
        $region84: #{tpu_custom_call.1} parent=80 // pred_region
          _
        $region85: #{tpu_custom_call.1} parent=80 // pred_fallthru
          _
        %p296 = scmp.lt.s32.totalorder %s24, 1
        %s297 = scalar_select %p296, %s24, 1
        %s298 = smul.addr %s297, 2
        %s299 = smul.addr %s298, 4
        %s300 = scalar_lea.vmem %s0, %s299
        %p301 = pneg %p53
        %p302 = pneg %p50
        %p303 = pneg %p74
        %p304 = pneg %p71
        %s305 = sand.u32 %s87, 1
        %s306 = sand.u32 %s87, 1
        %s307 = smul.addr %s306, 8
        %s308 = scalar_lea.vmem [#allocation3], %s307
        %p309 = pneg %p100
        %p310 = pneg %p97
        %p311 = pneg %p121
        %p312 = pneg %p118
        %p313 = pneg %p142
        %p314 = pneg %p139
        %p315 = pneg %p163
        %p316 = pneg %p160
        %p317 = pneg %p191
        %p318 = pneg %p188
        %s319 = sand.u32 %s178, 1
        %s320 = scalar_lea.sflag [#allocation5], %s319
        %s321 = sand.u32 %s178, 1
        %s322 = smul.addr %s321, 8
        %s323 = scalar_lea.vmem [#allocation4], %s322
        %p324 = scmp.lt.s32.totalorder %s24, 1
        %s325 = scalar_select %p324, %s24, 1
        %s326 = smul.addr %s325, 2
        %s327 = smul.addr %s326, 4
        %s328 = scalar_lea.vmem %s0, %s327
        %p330 = scmp.eq.s32.totalorder %s25, 0
        // Predicated region
        $region86: #{tpu_custom_call.1} parent=80 // pred_check
          %p331 = pneg %p330
        $region87: #{tpu_custom_call.1} parent=80 // pred_check_branch
          %333 = sbr.rel (%p331) target = $region89
        $region88: #{tpu_custom_call.1} parent=80 // pred_region
          %v334 = vld [vmem:[%s328] sm:$0xff]
          %v335 = vld [vmem:[%s1] sm:$0xf]
          %v336 = vld [vmem:[%s1 + $0x4] sm:$0xf]
          %v337 = vld [vmem:[%s1 + $0x8] sm:$0xf]
          %v338 = vld [vmem:[%s1 + $0xc] sm:$0xf]
          %v339 = vld [vmem:[%s1 + $0x10] sm:$0xf]
          %v340 = vld [vmem:[%s1 + $0x14] sm:$0xf]
          %v341 = vld [vmem:[%s1 + $0x18] sm:$0xf]
          %v342 = vld [vmem:[%s1 + $0x1c] sm:$0xf]
          %v343 = vld [vmem:[%s1 + $0x20] sm:$0xf]
          %v344 = vld [vmem:[%s1 + $0x24] sm:$0xf]
          %v345 = vld [vmem:[%s1 + $0x28] sm:$0xf]
          %v346 = vld [vmem:[%s1 + $0x2c] sm:$0xf]
          %v347 = vld [vmem:[%s1 + $0x30] sm:$0xf]
          %v348 = vld [vmem:[%s1 + $0x34] sm:$0xf]
          %v349 = vld [vmem:[%s1 + $0x38] sm:$0xf]
          %v350 = vld [vmem:[%s1 + $0x3c] sm:$0xf]
          %v351 = vld [vmem:[%s1 + $0x40] sm:$0xf]
          %v352 = vld [vmem:[%s1 + $0x44] sm:$0xf]
          %v353 = vld [vmem:[%s1 + $0x48] sm:$0xf]
          %v354 = vld [vmem:[%s1 + $0x4c] sm:$0xf]
          %v355 = vld [vmem:[%s1 + $0x50] sm:$0xf]
          %v356 = vld [vmem:[%s1 + $0x54] sm:$0xf]
          %v357 = vld [vmem:[%s1 + $0x58] sm:$0xf]
          %v358 = vld [vmem:[%s1 + $0x5c] sm:$0xf]
          %v359 = vld [vmem:[%s1 + $0x60] sm:$0xf]
          %v360 = vld [vmem:[%s1 + $0x64] sm:$0xf]
          %v361 = vld [vmem:[%s1 + $0x68] sm:$0xf]
          %v362 = vld [vmem:[%s1 + $0x6c] sm:$0xf]
          %v363 = vld [vmem:[%s1 + $0x70] sm:$0xf]
          %v364 = vld [vmem:[%s1 + $0x74] sm:$0xf]
          %v365 = vld [vmem:[%s1 + $0x78] sm:$0xf]
          %v366 = vld [vmem:[%s1 + $0x7c] sm:$0xf]
          %v368 = vunpack.c.l.b16 %v334
          %v369 = vunpack.c.h.b16 %v334
          %v370 = vpack.c.b16 %v368, %v368
          %v371 = vpack.c.b16 %v369, %v369
          %v406 = vunpack.c.l.b16 %v335
          %v407 = vunpack.c.l.b16 %v336
          %v408 = vunpack.c.l.b16 %v337
          %v409 = vunpack.c.l.b16 %v338
          %v410 = vunpack.c.l.b16 %v339
          %v411 = vunpack.c.l.b16 %v340
          %v412 = vunpack.c.l.b16 %v341
          %v413 = vunpack.c.l.b16 %v342
          %v414 = vunpack.c.l.b16 %v343
          %v415 = vunpack.c.l.b16 %v344
          %v416 = vunpack.c.l.b16 %v345
          %v417 = vunpack.c.l.b16 %v346
          %v418 = vunpack.c.l.b16 %v347
          %v419 = vunpack.c.l.b16 %v348
          %v420 = vunpack.c.l.b16 %v349
          %v421 = vunpack.c.l.b16 %v350
          %v422 = vunpack.c.l.b16 %v351
          %v423 = vunpack.c.l.b16 %v352
          %v424 = vunpack.c.l.b16 %v353
          %v425 = vunpack.c.l.b16 %v354
          %v426 = vunpack.c.l.b16 %v355
          %v427 = vunpack.c.l.b16 %v356
          %v428 = vunpack.c.l.b16 %v357
          %v429 = vunpack.c.l.b16 %v358
          %v430 = vunpack.c.l.b16 %v359
          %v431 = vunpack.c.l.b16 %v360
          %v432 = vunpack.c.l.b16 %v361
          %v433 = vunpack.c.l.b16 %v362
          %v434 = vunpack.c.l.b16 %v363
          %v435 = vunpack.c.l.b16 %v364
          %v436 = vunpack.c.l.b16 %v365
          %v437 = vunpack.c.l.b16 %v366
          %v438 = vpack.c.b16 %v407, %v406
          %v439 = vpack.c.b16 %v409, %v408
          %v440 = vpack.c.b16 %v411, %v410
          %v441 = vpack.c.b16 %v413, %v412
          %v442 = vpack.c.b16 %v415, %v414
          %v443 = vpack.c.b16 %v417, %v416
          %v444 = vpack.c.b16 %v419, %v418
          %v445 = vpack.c.b16 %v421, %v420
          %v446 = vpack.c.b16 %v423, %v422
          %v447 = vpack.c.b16 %v425, %v424
          %v448 = vpack.c.b16 %v427, %v426
          %v449 = vpack.c.b16 %v429, %v428
          %v450 = vpack.c.b16 %v431, %v430
          %v451 = vpack.c.b16 %v433, %v432
          %v452 = vpack.c.b16 %v435, %v434
          %v453 = vpack.c.b16 %v437, %v436
          %470 = vmatprep.subr.bf16.mxu0 0
          %471 = vmatpush1.bf16.msra.mxu0 %v438
          %472 = vmatprep.subr.bf16.mxu0 0
          %473 = vmatpush1.bf16.msra.mxu0 %v439
          %474 = vmatprep.subr.bf16.mxu0 0
          %475 = vmatpush1.bf16.msra.mxu0 %v440
          %476 = vmatprep.subr.bf16.mxu0 0
          %477 = vmatpush1.bf16.msra.mxu0 %v441
          %478 = vmatprep.subr.bf16.mxu0 0
          %479 = vmatpush1.bf16.msra.mxu0 %v442
          %480 = vmatprep.subr.bf16.mxu0 0
          %481 = vmatpush1.bf16.msra.mxu0 %v443
          %482 = vmatprep.subr.bf16.mxu0 0
          %483 = vmatpush1.bf16.msra.mxu0 %v444
          %484 = vmatprep.subr.bf16.mxu0 0
          %485 = vmatpush1.bf16.msra.mxu0 %v445
          %486 = vmatprep.subr.bf16.mxu0 0
          %487 = vmatpush1.bf16.msra.mxu0 %v446
          %488 = vmatprep.subr.bf16.mxu0 0
          %489 = vmatpush1.bf16.msra.mxu0 %v447
          %490 = vmatprep.subr.bf16.mxu0 0
          %491 = vmatpush1.bf16.msra.mxu0 %v448
          %492 = vmatprep.subr.bf16.mxu0 0
          %493 = vmatpush1.bf16.msra.mxu0 %v449
          %494 = vmatprep.subr.bf16.mxu0 0
          %495 = vmatpush1.bf16.msra.mxu0 %v450
          %496 = vmatprep.subr.bf16.mxu0 0
          %497 = vmatpush1.bf16.msra.mxu0 %v451
          %498 = vmatprep.subr.bf16.mxu0 0
          %499 = vmatpush1.bf16.msra.mxu0 %v452
          %500 = vmatprep.subr.bf16.mxu0 0
          %501 = vmatpush1.bf16.msra.mxu0 %v453
          %502 = vmatprep.mubr.bf16.mxu0 %v371
          %503 = vmatmul.mubr.bf16.gmra.mrb[0].mxu0 %v370
          %v504 = vpop.f32.mrb[0].mxu0
          %v505 = vadd.f32 0.0, %v504
          %v506 = vpop.f32.mrb[0].mxu0
          %v507 = vpop.f32.mrb[0].mxu0
          %v508 = vpop.f32.mrb[0].mxu0
          %509 = vdwg.mxu0
          %v510 = vlaneseq
          %v511 = vand.u32 %v510, 127
          %vm512 = vcmp.ge.s32.totalorder %v511, 0
          %vm513 = vcmp.lt.s32.totalorder %v511, 1
          %vm514 = vmand %vm512, %vm513
          %v515 = vsel %vm514, 1, 0
          %vm516 = vcmp.eq.s32.totalorder %v515, 1
          %v517 = vsel %vm516, %v505, 0.0
          %v518 = vpack.c.bf16 %v517, %v517
          %v519 = vld [vmem:[%s4] sm:$0xf]
          %vm520 = vcmp.ge.s32.totalorder %v511, 1
          %vm521 = vcmp.lt.s32.totalorder %v511, 5
          %vm522 = vmand %vm520, %vm521
          %v523 = vsel %vm522, 1, 0
          %vm524 = vcmp.eq.s32.totalorder %v523, 1
          %v525 = vsel %vm524, %v505, 0.0
          %v526 = vpack.c.bf16 %v525, %v525
          %s527 = scalar_lea.vmem %s4, 4
          %v528 = vld [vmem:[%s527] sm:$0xf]
          %vm529 = vcmask 64512
          %v531 = vsel %vm529, %v528, 0
          %vm533 = vcmask 1043456
          %v535 = vsel %vm533, %v526, 0
          %537 = vmatprep.subr.bf16.mxu0 0
          %538 = vmatpush1.bf16.msra.mxu0 %v535
          %539 = vmatprep.subr.bf16.mxu0 0
          %540 = vmatpush1.bf16.msra.mxu0 0
          %541 = vmatprep.subr.bf16.mxu0 0
          %542 = vmatpush1.bf16.msra.mxu0 0
          %543 = vmatprep.subr.bf16.mxu0 0
          %544 = vmatpush1.bf16.msra.mxu0 0
          %545 = vmatprep.subr.bf16.mxu0 0
          %546 = vmatpush1.bf16.msra.mxu0 0
          %547 = vmatprep.subr.bf16.mxu0 0
          %548 = vmatpush1.bf16.msra.mxu0 0
          %549 = vmatprep.subr.bf16.mxu0 0
          %550 = vmatpush1.bf16.msra.mxu0 0
          %551 = vmatprep.subr.bf16.mxu0 0
          %552 = vmatpush1.bf16.msra.mxu0 0
          %553 = vmatprep.subr.bf16.mxu0 0
          %554 = vmatpush1.bf16.msra.mxu0 0
          %555 = vmatprep.subr.bf16.mxu0 0
          %556 = vmatpush1.bf16.msra.mxu0 0
          %557 = vmatprep.subr.bf16.mxu0 0
          %558 = vmatpush1.bf16.msra.mxu0 0
          %559 = vmatprep.subr.bf16.mxu0 0
          %560 = vmatpush1.bf16.msra.mxu0 0
          %561 = vmatprep.subr.bf16.mxu0 0
          %562 = vmatpush1.bf16.msra.mxu0 0
          %563 = vmatprep.subr.bf16.mxu0 0
          %564 = vmatpush1.bf16.msra.mxu0 0
          %565 = vmatprep.subr.bf16.mxu0 0
          %566 = vmatpush1.bf16.msra.mxu0 0
          %567 = vmatprep.subr.bf16.mxu0 0
          %568 = vmatpush1.bf16.msra.mxu0 0
          %569 = vmatprep.mubr.bf16.mxu0 0
          %570 = vmatmul.mubr.bf16.gmra.mrb[0].mxu0 %v531
          %v571 = vpop.f32.mrb[0].mxu0
          %v572 = vadd.f32 0.0, %v571
          %v573 = vpop.f32.mrb[0].mxu0
          %v574 = vpop.f32.mrb[0].mxu0
          %v575 = vpop.f32.mrb[0].mxu0
          %576 = vdwg.mxu0
          %v578 = vsel %vm529, %v519, 0
          %v581 = vsel %vm533, %v518, 0
          %583 = vmatprep.subr.bf16.mxu0 0
          %584 = vmatpush1.bf16.msra.mxu0 %v581
          %585 = vmatprep.subr.bf16.mxu0 0
          %586 = vmatpush1.bf16.msra.mxu0 0
          %587 = vmatprep.subr.bf16.mxu0 0
          %588 = vmatpush1.bf16.msra.mxu0 0
          %589 = vmatprep.subr.bf16.mxu0 0
          %590 = vmatpush1.bf16.msra.mxu0 0
          %591 = vmatprep.subr.bf16.mxu0 0
          %592 = vmatpush1.bf16.msra.mxu0 0
          %593 = vmatprep.subr.bf16.mxu0 0
          %594 = vmatpush1.bf16.msra.mxu0 0
          %595 = vmatprep.subr.bf16.mxu0 0
          %596 = vmatpush1.bf16.msra.mxu0 0
          %597 = vmatprep.subr.bf16.mxu0 0
          %598 = vmatpush1.bf16.msra.mxu0 0
          %599 = vmatprep.subr.bf16.mxu0 0
          %600 = vmatpush1.bf16.msra.mxu0 0
          %601 = vmatprep.subr.bf16.mxu0 0
          %602 = vmatpush1.bf16.msra.mxu0 0
          %603 = vmatprep.subr.bf16.mxu0 0
          %604 = vmatpush1.bf16.msra.mxu0 0
          %605 = vmatprep.subr.bf16.mxu0 0
          %606 = vmatpush1.bf16.msra.mxu0 0
          %607 = vmatprep.subr.bf16.mxu0 0
          %608 = vmatpush1.bf16.msra.mxu0 0
          %609 = vmatprep.subr.bf16.mxu0 0
          %610 = vmatpush1.bf16.msra.mxu0 0
          %611 = vmatprep.subr.bf16.mxu0 0
          %612 = vmatpush1.bf16.msra.mxu0 0
          %613 = vmatprep.subr.bf16.mxu0 0
          %614 = vmatpush1.bf16.msra.mxu0 0
          %615 = vmatprep.mubr.bf16.mxu0 0
          %616 = vmatmul.mubr.bf16.gmra.mrb[0].mxu0 %v578
          %v617 = vpop.f32.mrb[0].mxu0
          %v618 = vadd.f32 %v572, %v617
          %v619 = vpop.f32.mrb[0].mxu0
          %v620 = vpop.f32.mrb[0].mxu0
          %v621 = vpop.f32.mrb[0].mxu0
          %622 = vdwg.mxu0
          %vm623 = vcmp.ge.s32.totalorder %v511, 5
          %vm624 = vcmp.lt.s32.totalorder %v511, 14
          %vm625 = vmand %vm623, %vm624
          %v626 = vsel %vm625, 1, 0
          %vm627 = vcmp.eq.s32.totalorder %v626, 1
          %v628 = vsel %vm627, %v505, 0.0
          %v629 = vpack.c.bf16 %v628, %v628
          %s630 = scalar_lea.vmem %s4, 8
          %v631 = vld [vmem:[%s630] sm:$0xf]
          %v633 = vsel %vm529, %v631, 0
          %v636 = vsel %vm533, %v629, 0
          %638 = vmatprep.subr.bf16.mxu0 0
          %639 = vmatpush1.bf16.msra.mxu0 %v636
          %640 = vmatprep.subr.bf16.mxu0 0
          %641 = vmatpush1.bf16.msra.mxu0 0
          %642 = vmatprep.subr.bf16.mxu0 0
          %643 = vmatpush1.bf16.msra.mxu0 0
          %644 = vmatprep.subr.bf16.mxu0 0
          %645 = vmatpush1.bf16.msra.mxu0 0
          %646 = vmatprep.subr.bf16.mxu0 0
          %647 = vmatpush1.bf16.msra.mxu0 0
          %648 = vmatprep.subr.bf16.mxu0 0
          %649 = vmatpush1.bf16.msra.mxu0 0
          %650 = vmatprep.subr.bf16.mxu0 0
          %651 = vmatpush1.bf16.msra.mxu0 0
          %652 = vmatprep.subr.bf16.mxu0 0
          %653 = vmatpush1.bf16.msra.mxu0 0
          %654 = vmatprep.subr.bf16.mxu0 0
          %655 = vmatpush1.bf16.msra.mxu0 0
          %656 = vmatprep.subr.bf16.mxu0 0
          %657 = vmatpush1.bf16.msra.mxu0 0
          %658 = vmatprep.subr.bf16.mxu0 0
          %659 = vmatpush1.bf16.msra.mxu0 0
          %660 = vmatprep.subr.bf16.mxu0 0
          %661 = vmatpush1.bf16.msra.mxu0 0
          %662 = vmatprep.subr.bf16.mxu0 0
          %663 = vmatpush1.bf16.msra.mxu0 0
          %664 = vmatprep.subr.bf16.mxu0 0
          %665 = vmatpush1.bf16.msra.mxu0 0
          %666 = vmatprep.subr.bf16.mxu0 0
          %667 = vmatpush1.bf16.msra.mxu0 0
          %668 = vmatprep.subr.bf16.mxu0 0
          %669 = vmatpush1.bf16.msra.mxu0 0
          %670 = vmatprep.mubr.bf16.mxu0 0
          %671 = vmatmul.mubr.bf16.gmra.mrb[0].mxu0 %v633
          %v672 = vpop.f32.mrb[0].mxu0
          %v673 = vadd.f32 0.0, %v672
          %v674 = vpop.f32.mrb[0].mxu0
          %v675 = vpop.f32.mrb[0].mxu0
          %v676 = vpop.f32.mrb[0].mxu0
          %677 = vdwg.mxu0
          %v678 = vadd.f32 %v618, %v673
          %v679 = vpack.c.bf16 %v678, %v678
          %vm680 = vcmask 125952
          %681 = vst.msk [vmem:[#allocation2] sm:$0xf] %vm680, %v679
        $region89: #{tpu_custom_call.1} parent=80 // pred_fallthru
          _
        %s682 = smul.u32 %s25, 128
        %s683 = sshra.s32 %s682, 7
        %s684 = sand.u32 %s682, 127
        %s685 = smul.addr %s683, 4
        %s686 = scalar_lea.vmem %s328, %s685
        %v687 = vld [vmem:[%s686] sm:$0xf]
        %v688 = vld [vmem:[%s3] sm:$0xf]
        %v689 = vld [vmem:[#allocation2] sm:$0xf]
        %v690 = vld [vmem:[%s292] sm:$0xf]
        %v691 = vld [vmem:[%s292 + $0x4] sm:$0xf]
        %v694 = vunpack.c.l.b16 %v690
        %v695 = vunpack.c.l.b16 %v691
        %v696 = vpack.c.b16 %v695, %v694
        %vm698 = vcmask 130048
        %v700 = vsel %vm698, %v689, 0
        %702 = vmatprep.subr.bf16.mxu0 0
        %703 = vmatpush1.bf16.msra.mxu0 %v696
        %704 = vmatprep.subr.bf16.mxu0 0
        %705 = vmatpush1.bf16.msra.mxu0 0
        %706 = vmatprep.subr.bf16.mxu0 0
        %707 = vmatpush1.bf16.msra.mxu0 0
        %708 = vmatprep.subr.bf16.mxu0 0
        %709 = vmatpush1.bf16.msra.mxu0 0
        %710 = vmatprep.subr.bf16.mxu0 0
        %711 = vmatpush1.bf16.msra.mxu0 0
        %712 = vmatprep.subr.bf16.mxu0 0
        %713 = vmatpush1.bf16.msra.mxu0 0
        %714 = vmatprep.subr.bf16.mxu0 0
        %715 = vmatpush1.bf16.msra.mxu0 0
        %716 = vmatprep.subr.bf16.mxu0 0
        %717 = vmatpush1.bf16.msra.mxu0 0
        %718 = vmatprep.subr.bf16.mxu0 0
        %719 = vmatpush1.bf16.msra.mxu0 0
        %720 = vmatprep.subr.bf16.mxu0 0
        %721 = vmatpush1.bf16.msra.mxu0 0
        %722 = vmatprep.subr.bf16.mxu0 0
        %723 = vmatpush1.bf16.msra.mxu0 0
        %724 = vmatprep.subr.bf16.mxu0 0
        %725 = vmatpush1.bf16.msra.mxu0 0
        %726 = vmatprep.subr.bf16.mxu0 0
        %727 = vmatpush1.bf16.msra.mxu0 0
        %728 = vmatprep.subr.bf16.mxu0 0
        %729 = vmatpush1.bf16.msra.mxu0 0
        %730 = vmatprep.subr.bf16.mxu0 0
        %731 = vmatpush1.bf16.msra.mxu0 0
        %732 = vmatprep.subr.bf16.mxu0 0
        %733 = vmatpush1.bf16.msra.mxu0 0
        %734 = vmatprep.mubr.bf16.mxu0 0
        %735 = vmatmul.mubr.bf16.gmra.mrb[0].mxu0 %v700
        %v736 = vpop.f32.mrb[0].mxu0
        %v737 = vadd.f32 0.0, %v736
        %v738 = vpop.f32.mrb[0].mxu0
        %v739 = vpop.f32.mrb[0].mxu0
        %v740 = vpop.f32.mrb[0].mxu0
        %741 = vdwg.mxu0
        %vm742 = vcmask 64512
        %v744 = vsel %vm742, %v688, 0
        %vm746 = vcmask 1043456
        %v748 = vsel %vm746, %v687, 0
        %750 = vmatprep.subr.bf16.mxu0 0
        %751 = vmatpush1.bf16.msra.mxu0 %v748
        %752 = vmatprep.subr.bf16.mxu0 0
        %753 = vmatpush1.bf16.msra.mxu0 0
        %754 = vmatprep.subr.bf16.mxu0 0
        %755 = vmatpush1.bf16.msra.mxu0 0
        %756 = vmatprep.subr.bf16.mxu0 0
        %757 = vmatpush1.bf16.msra.mxu0 0
        %758 = vmatprep.subr.bf16.mxu0 0
        %759 = vmatpush1.bf16.msra.mxu0 0
        %760 = vmatprep.subr.bf16.mxu0 0
        %761 = vmatpush1.bf16.msra.mxu0 0
        %762 = vmatprep.subr.bf16.mxu0 0
        %763 = vmatpush1.bf16.msra.mxu0 0
        %764 = vmatprep.subr.bf16.mxu0 0
        %765 = vmatpush1.bf16.msra.mxu0 0
        %766 = vmatprep.subr.bf16.mxu0 0
        %767 = vmatpush1.bf16.msra.mxu0 0
        %768 = vmatprep.subr.bf16.mxu0 0
        %769 = vmatpush1.bf16.msra.mxu0 0
        %770 = vmatprep.subr.bf16.mxu0 0
        %771 = vmatpush1.bf16.msra.mxu0 0
        %772 = vmatprep.subr.bf16.mxu0 0
        %773 = vmatpush1.bf16.msra.mxu0 0
        %774 = vmatprep.subr.bf16.mxu0 0
        %775 = vmatpush1.bf16.msra.mxu0 0
        %776 = vmatprep.subr.bf16.mxu0 0
        %777 = vmatpush1.bf16.msra.mxu0 0
        %778 = vmatprep.subr.bf16.mxu0 0
        %779 = vmatpush1.bf16.msra.mxu0 0
        %780 = vmatprep.subr.bf16.mxu0 0
        %781 = vmatpush1.bf16.msra.mxu0 0
        %782 = vmatprep.mubr.bf16.mxu0 0
        %783 = vmatmul.mubr.bf16.gmra.mrb[0].mxu0 %v744
        %v784 = vpop.f32.mrb[0].mxu0
        %v785 = vadd.f32 %v737, %v784
        %v786 = vpop.f32.mrb[0].mxu0
        %v787 = vpop.f32.mrb[0].mxu0
        %v788 = vpop.f32.mrb[0].mxu0
        %789 = vdwg.mxu0
        %v790 = vld [vmem:[%s5] sm:$0xff]
        %792 = vset.pattern.permute.xlu0 0
        %793 = vperm.xlu0 %792, %v790
        %v794 = vpop.permute.xlu0 %793
        %v796 = vadd.f32 %v785, %v794
        %797 = vst [vmem:[%s323] sm:$0xff] %v796
        %s798 = sand.u32 %s178, 1
        %s799 = scalar_lea.sflag [#allocation5], %s798
        %s800 = sand.u32 %s178, 1
        %s801 = smul.addr %s800, 8
        %s802 = scalar_lea.vmem [#allocation4], %s801
        // Predicated region
        $region90: #{tpu_custom_call.1} parent=80 // pred_check
          %p803 = pneg %p188
        $region91: #{tpu_custom_call.1} parent=80 // pred_check_branch
          %805 = sbr.rel (%p803) target = $region93
        $region92: #{tpu_custom_call.1} parent=80 // pred_region
          %s807 = ssub.s32 128, 128
          %808 = vsyncadd %s799, %s807
          %s809 = smul.addr %s24, 2
          %s810 = sadd.s32 %s25, %s809
          %s811 = smul.addr %s810, 128
          %s812 = scalar_lea.hbm %s6, %s811
          %s814 = sshll.u32 %s802, 4
          %s815 = int_to_ptr.vmem [resolvable:$true] %s814
          %817 = dma.vmem_to_hbm [thread:$0]  %s815, 128, %s812, %s799
        $region93: #{tpu_custom_call.1} parent=80 // pred_fallthru
          _
      $region81: #{tpu_custom_call.1} parent=5 // pred_fallthru
        _
      %p818 = scmp.le.s32.totalorder 2, %s15
      // Predicated region
      $region94: #{tpu_custom_call.1} parent=5 // pred_check
        %p819 = pneg %p818
      $region95: #{tpu_custom_call.1} parent=5 // pred_check_branch
        %821 = sbr.rel (%p819) target = $region97
      $region96: #{tpu_custom_call.1} parent=5 // pred_region
        %s822 = ssub.s32 %s15, 2
        // Predicated region
        $region98: #{tpu_custom_call.1} parent=96 // pred_check
          %p823 = pneg %p194
        $region99: #{tpu_custom_call.1} parent=96 // pred_check_branch
          %825 = sbr.rel (%p823) target = $region101
        $region100: #{tpu_custom_call.1} parent=96 // pred_region
          %s826 = sand.u32 %s179, 1
          %s827 = scalar_lea.sflag [#allocation5], %s826
          %s828 = sand.u32 %s179, 1
          %s829 = smul.addr %s828, 8
          %s830 = scalar_lea.vmem [#allocation4], %s829
          %831 = dma.done %s827, 128
        $region101: #{tpu_custom_call.1} parent=96 // pred_fallthru
          _
      $region97: #{tpu_custom_call.1} parent=5 // pred_fallthru
        _
    $region6: #{tpu_custom_call.1} parent=1 // loop_footer
      %s19 = sadd.s32 1, %s15
    $region7: #{tpu_custom_call.1} parent=1 // loop_footer_branch
      %14 = sbr.rel target = $region3
    $region8: #{tpu_custom_call.1} parent=1 // loop_exit
      _
    %832 = vsyncpa [#allocation5], 1
    %s833 = scalar_lea.sflag [#allocation5], 1
    %834 = vsyncpa %s833, 1

</llo_original>
